<compile_context>
chip_gen: v7x
topology: tpu7x:2x2x1
jax: 0.10.0
libtpu: 0.0.40
codegen_flags: <defaults>
</compile_context>

<pallas_src>
import functools
import math

import jax
import jax.numpy as jnp
from jax import lax
from jax.experimental import pallas as pl
from jax.experimental.pallas import tpu as pltpu


_LN_EPS = 1e-5


def _tds_fc_kernel(x_ref, w1_ref, b1_ref, w2_ref, b2_ref, g_ref, beta_ref,
                   o_ref, *, eps):
    # x_ref block: (row_tile, F) -- a slab of the flattened (T*N) rows.
    x = x_ref[...]

    # fc_block: Linear -> ReLU -> Linear (f32 MXU accumulate).
    h = jnp.dot(x, w1_ref[...], preferred_element_type=jnp.float32) + b1_ref[...]
    h = jnp.maximum(h, 0.0)
    y = jnp.dot(h, w2_ref[...], preferred_element_type=jnp.float32) + b2_ref[...]

    # Residual connection.
    y = y + x

    # LayerNorm over the feature axis (biased variance, like torch.nn.LayerNorm).
    mean = jnp.mean(y, axis=-1, keepdims=True)
    centered = y - mean
    var = jnp.mean(centered * centered, axis=-1, keepdims=True)
    inv = lax.rsqrt(var + eps)          # EUP rsqrt; avoids VALU divide chain
    o_ref[...] = centered * inv * g_ref[...] + beta_ref[...]


def tds_fully_connected_block(x, params):
    """x: (T, N, F) float32.  params: dict with transposed weights / biases."""
    T, N, F = x.shape
    R = T * N
    xf = x.reshape(R, F)

    # Row tiling: one large slab per grid step.  Prefer a 2-step parallel grid
    # (v7x megacore) with sublane-aligned tiles; otherwise a single step.
    if R % 16 == 0:
        row_tile = R // 2
    else:
        row_tile = R
    grid = (R // row_tile,)

    w1, b1 = params["w1"], params["b1"]
    w2, b2 = params["w2"], params["b2"]
    gamma, beta = params["gamma"], params["beta"]

    kernel = functools.partial(_tds_fc_kernel, eps=_LN_EPS)

    row_spec = pl.BlockSpec((row_tile, F), lambda i: (i, 0))
    w_spec = pl.BlockSpec((F, F), lambda i: (0, 0))
    vec_spec = pl.BlockSpec((1, F), lambda i: (0, 0))

    cost = pl.CostEstimate(
        flops=2 * 2 * R * F * F + 8 * R * F,   # two matmuls + elementwise/LN
        transcendentals=R,                     # one rsqrt per row
        bytes_accessed=4 * (2 * R * F + 2 * F * F + 4 * F),
    )

    out = pl.pallas_call(
        kernel,
        out_shape=jax.ShapeDtypeStruct((R, F), jnp.float32),
        grid_spec=pltpu.PrefetchScalarGridSpec(
            num_scalar_prefetch=0,
            grid=grid,
            in_specs=[row_spec,            # x rows
                      w_spec, vec_spec,    # Linear 1
                      w_spec, vec_spec,    # Linear 2
                      vec_spec, vec_spec], # LayerNorm gamma / beta
            out_specs=row_spec,
        ),
        compiler_params=pltpu.CompilerParams(
            dimension_semantics=("parallel",)),
        cost_estimate=cost,
    )(xf, w1, b1, w2, b2, gamma, beta)

    return out.reshape(T, N, F)


def _reference(x, params):
    """Pure-JAX reference mirroring the PyTorch forward (eval mode)."""
    h = jnp.maximum(
        jnp.einsum("tnf,fg->tng", x, params["w1"]) + params["b1"][0], 0.0)
    y = jnp.einsum("tnf,fg->tng", h, params["w2"]) + params["b2"][0]
    y = y + x
    mean = jnp.mean(y, axis=-1, keepdims=True)
    var = jnp.mean((y - mean) ** 2, axis=-1, keepdims=True)
    return ((y - mean) / jnp.sqrt(var + _LN_EPS)) * params["gamma"][0] \
        + params["beta"][0]


def _init_params(key, num_features):
    # Deterministic synthetic init (PyTorch Linear-style uniform bound);
    # LayerNorm affine init: gamma=1, beta=0.
    bound = 1.0 / math.sqrt(num_features)
    k1, k2, k3, k4 = jax.random.split(key, 4)
    return {
        # stored transposed: (in_features, out_features)
        "w1": jax.random.uniform(k1, (num_features, num_features),
                                 jnp.float32, -bound, bound),
        "b1": jax.random.uniform(k2, (1, num_features),
                                 jnp.float32, -bound, bound),
        "w2": jax.random.uniform(k3, (num_features, num_features),
                                 jnp.float32, -bound, bound),
        "b2": jax.random.uniform(k4, (1, num_features),
                                 jnp.float32, -bound, bound),
        "gamma": jnp.ones((1, num_features), jnp.float32),
        "beta": jnp.zeros((1, num_features), jnp.float32),
    }


if __name__ == "__main__":
    T, N, F = 8, 2, 32    # (T, N, num_features)

    key = jax.random.PRNGKey(0)
    kx, kp = jax.random.split(key)
    x = jax.random.normal(kx, (T, N, F), dtype=jnp.float32)
    params = _init_params(kp, F)

    out = tds_fully_connected_block(x, params)
    out = jax.block_until_ready(out)

    ref = _reference(x, params)
    assert out.shape == (T, N, F)
    assert jnp.allclose(out, ref, atol=1e-4, rtol=1e-4), "mismatch vs JAX reference"

    print("KERNEL_OK")
</pallas_src>

<mosaic_0001>
module attributes {stable_mosaic.version = 11 : i64} {
  func.func @_tds_fc_kernel(%arg0: i32, %arg1: memref<8x32xf32, #tpu.memory_space<vmem>>, %arg2: memref<32x32xf32, #tpu.memory_space<vmem>>, %arg3: memref<1x32xf32, #tpu.memory_space<vmem>>, %arg4: memref<32x32xf32, #tpu.memory_space<vmem>>, %arg5: memref<1x32xf32, #tpu.memory_space<vmem>>, %arg6: memref<1x32xf32, #tpu.memory_space<vmem>>, %arg7: memref<1x32xf32, #tpu.memory_space<vmem>>, %arg8: memref<8x32xf32, #tpu.memory_space<vmem>>) attributes {dimension_semantics = [#tpu.dimension_semantics<parallel>], iteration_bounds = array<i64: 2>, scalar_prefetch = 0 : i64, scratch_operands = 0 : i64, tpu.core_type = #tpu.core_type<tc>, window_params = [{transform_indices = @transform_0, window_bounds = array<i64: 8, 32>}, {pipeline_mode = #tpu.pipeline_mode<synchronous>, transform_indices = @transform_1, window_bounds = array<i64: 32, 32>}, {pipeline_mode = #tpu.pipeline_mode<synchronous>, transform_indices = @transform_2, window_bounds = array<i64: 1, 32>}, {pipeline_mode = #tpu.pipeline_mode<synchronous>, transform_indices = @transform_3, window_bounds = array<i64: 32, 32>}, {pipeline_mode = #tpu.pipeline_mode<synchronous>, transform_indices = @transform_4, window_bounds = array<i64: 1, 32>}, {pipeline_mode = #tpu.pipeline_mode<synchronous>, transform_indices = @transform_5, window_bounds = array<i64: 1, 32>}, {pipeline_mode = #tpu.pipeline_mode<synchronous>, transform_indices = @transform_6, window_bounds = array<i64: 1, 32>}, {transform_indices = @transform_7, window_bounds = array<i64: 8, 32>}]} {
    %c0 = arith.constant 0 : index
    %c0_0 = arith.constant 0 : index
    %0 = vector.load %arg1[%c0, %c0_0] : memref<8x32xf32, #tpu.memory_space<vmem>>, vector<8x32xf32>
    %c0_1 = arith.constant 0 : index
    %c0_2 = arith.constant 0 : index
    %1 = vector.load %arg2[%c0_1, %c0_2] : memref<32x32xf32, #tpu.memory_space<vmem>>, vector<32x32xf32>
    %cst = arith.constant dense<0.000000e+00> : vector<8x32xf32>
    %2 = tpu.matmul %0, %1, %cst {dimension_numbers = #tpu.dot_dimension_numbers<[1], [0], [0], [1], [0, 0, 1, 1], [], []>} : vector<8x32xf32>, vector<32x32xf32>, vector<8x32xf32> -> vector<8x32xf32>
    %c0_3 = arith.constant 0 : index
    %c0_4 = arith.constant 0 : index
    %3 = vector.load %arg3[%c0_3, %c0_4] : memref<1x32xf32, #tpu.memory_space<vmem>>, vector<1x32xf32>
    %4 = vector.broadcast %3 : vector<1x32xf32> to vector<8x32xf32>
    %5 = arith.addf %2, %4 : vector<8x32xf32>
    %cst_5 = arith.constant 0.000000e+00 : f32
    %6 = vector.broadcast %cst_5 : f32 to vector<8x32xf32>
    %7 = arith.maximumf %5, %6 : vector<8x32xf32>
    %c0_6 = arith.constant 0 : index
    %c0_7 = arith.constant 0 : index
    %8 = vector.load %arg4[%c0_6, %c0_7] : memref<32x32xf32, #tpu.memory_space<vmem>>, vector<32x32xf32>
    %cst_8 = arith.constant dense<0.000000e+00> : vector<8x32xf32>
    %9 = tpu.matmul %7, %8, %cst_8 {dimension_numbers = #tpu.dot_dimension_numbers<[1], [0], [0], [1], [0, 0, 1, 1], [], []>} : vector<8x32xf32>, vector<32x32xf32>, vector<8x32xf32> -> vector<8x32xf32>
    %c0_9 = arith.constant 0 : index
    %c0_10 = arith.constant 0 : index
    %10 = vector.load %arg5[%c0_9, %c0_10] : memref<1x32xf32, #tpu.memory_space<vmem>>, vector<1x32xf32>
    %11 = vector.broadcast %10 : vector<1x32xf32> to vector<8x32xf32>
    %12 = arith.addf %9, %11 : vector<8x32xf32>
    %13 = arith.addf %12, %0 : vector<8x32xf32>
    %cst_11 = arith.constant dense<0.000000e+00> : vector<8xf32>
    %14 = vector.multi_reduction <add>, %13, %cst_11 [1] : vector<8x32xf32> to vector<8xf32>
    %15 = vector.shape_cast %14 : vector<8xf32> to vector<8x1xf32>
    %cst_12 = arith.constant 3.200000e+01 : f32
    %16 = vector.broadcast %cst_12 : f32 to vector<8x1xf32>
    %17 = arith.divf %15, %16 : vector<8x1xf32>
    %18 = vector.broadcast %17 : vector<8x1xf32> to vector<8x32xf32>
    %19 = arith.subf %13, %18 : vector<8x32xf32>
    %20 = arith.mulf %19, %19 : vector<8x32xf32>
    %cst_13 = arith.constant dense<0.000000e+00> : vector<8xf32>
    %21 = vector.multi_reduction <add>, %20, %cst_13 [1] : vector<8x32xf32> to vector<8xf32>
    %22 = vector.shape_cast %21 : vector<8xf32> to vector<8x1xf32>
    %cst_14 = arith.constant 3.200000e+01 : f32
    %23 = vector.broadcast %cst_14 : f32 to vector<8x1xf32>
    %24 = arith.divf %22, %23 : vector<8x1xf32>
    %cst_15 = arith.constant 9.99999974E-6 : f32
    %25 = vector.broadcast %cst_15 : f32 to vector<8x1xf32>
    %26 = arith.addf %24, %25 : vector<8x1xf32>
    %27 = math.rsqrt %26 : vector<8x1xf32>
    %28 = vector.broadcast %27 : vector<8x1xf32> to vector<8x32xf32>
    %29 = arith.mulf %19, %28 : vector<8x32xf32>
    %c0_16 = arith.constant 0 : index
    %c0_17 = arith.constant 0 : index
    %30 = vector.load %arg6[%c0_16, %c0_17] : memref<1x32xf32, #tpu.memory_space<vmem>>, vector<1x32xf32>
    %31 = vector.broadcast %30 : vector<1x32xf32> to vector<8x32xf32>
    %32 = arith.mulf %29, %31 : vector<8x32xf32>
    %c0_18 = arith.constant 0 : index
    %c0_19 = arith.constant 0 : index
    %33 = vector.load %arg7[%c0_18, %c0_19] : memref<1x32xf32, #tpu.memory_space<vmem>>, vector<1x32xf32>
    %34 = vector.broadcast %33 : vector<1x32xf32> to vector<8x32xf32>
    %35 = arith.addf %32, %34 : vector<8x32xf32>
    %c0_20 = arith.constant 0 : index
    %c0_21 = arith.constant 0 : index
    %36 = vector.load %arg8[%c0_20, %c0_21] : memref<8x32xf32, #tpu.memory_space<vmem>>, vector<8x32xf32>
    tpu.vector_store %arg8[%c0_20, %c0_21], %35 {strides = array<i32>} : memref<8x32xf32, #tpu.memory_space<vmem>>, vector<8x32xf32>,
    return
  }
  func.func @transform_0(%arg0: i32) -> (i32, i32) {
    %c0_i32 = arith.constant 0 : i32
    %c0_i32_0 = arith.constant 0 : i32
    return %arg0, %c0_i32 : i32, i32
  }
  func.func @transform_1(%arg0: i32) -> (i32, i32) {
    %c0_i32 = arith.constant 0 : i32
    %c0_i32_0 = arith.constant 0 : i32
    %c0_i32_1 = arith.constant 0 : i32
    return %c0_i32, %c0_i32_0 : i32, i32
  }
  func.func @transform_2(%arg0: i32) -> (i32, i32) {
    %c0_i32 = arith.constant 0 : i32
    %c0_i32_0 = arith.constant 0 : i32
    %c0_i32_1 = arith.constant 0 : i32
    return %c0_i32, %c0_i32_0 : i32, i32
  }
  func.func @transform_3(%arg0: i32) -> (i32, i32) {
    %c0_i32 = arith.constant 0 : i32
    %c0_i32_0 = arith.constant 0 : i32
    %c0_i32_1 = arith.constant 0 : i32
    return %c0_i32, %c0_i32_0 : i32, i32
  }
  func.func @transform_4(%arg0: i32) -> (i32, i32) {
    %c0_i32 = arith.constant 0 : i32
    %c0_i32_0 = arith.constant 0 : i32
    %c0_i32_1 = arith.constant 0 : i32
    return %c0_i32, %c0_i32_0 : i32, i32
  }
  func.func @transform_5(%arg0: i32) -> (i32, i32) {
    %c0_i32 = arith.constant 0 : i32
    %c0_i32_0 = arith.constant 0 : i32
    %c0_i32_1 = arith.constant 0 : i32
    return %c0_i32, %c0_i32_0 : i32, i32
  }
  func.func @transform_6(%arg0: i32) -> (i32, i32) {
    %c0_i32 = arith.constant 0 : i32
    %c0_i32_0 = arith.constant 0 : i32
    %c0_i32_1 = arith.constant 0 : i32
    return %c0_i32, %c0_i32_0 : i32, i32
  }
  func.func @transform_7(%arg0: i32) -> (i32, i32) {
    %c0_i32 = arith.constant 0 : i32
    %c0_i32_0 = arith.constant 0 : i32
    return %arg0, %c0_i32 : i32, i32
  }
}

</mosaic_0001>

<llo_original>
// kernel: tpu_custom_call.1
$region0: #{tpu_custom_call.1}
  #allocation0 [shape = 'u32[]', space=smem, size = 0x4, offset = 0x4, fixed_abs, tag = 'smem constant byte address 0x4 - core index']
  #allocation1 [shape = 'u32[144,128]{1,0:T(1,128)}', space=vmem, size = 0x12000, scoped, tag = 'internal scratch']
  %s0 = inlined_call_operand.hbm [shape: f32[16,32], index: 0, kind: input, shape index: {}]
  %s1 = inlined_call_operand.hbm [shape: f32[32,32], index: 1, kind: input, shape index: {}]
  %s2 = inlined_call_operand.vmem [shape: f32[1,32], index: 2, kind: input, shape index: {}]
  %s3 = inlined_call_operand.hbm [shape: f32[32,32], index: 3, kind: input, shape index: {}]
  %s4 = inlined_call_operand.vmem [shape: f32[1,32], index: 4, kind: input, shape index: {}]
  %s5 = inlined_call_operand.vmem [shape: f32[1,32], index: 5, kind: input, shape index: {}]
  %s6 = inlined_call_operand.vmem [shape: f32[1,32], index: 6, kind: input, shape index: {}]
  %s7 = inlined_call_operand.hbm [shape: f32[16,32], index: 7, kind: output, shape index: {}]
  %s8 = sld [smem:[#allocation0]]
  $region73: #{tpu_custom_call.1} parent=0
    _
  %s10 = ssub.s32 1, %s8
  %s11 = scalar_select 0, %s10, %s8
  $region1: #{tpu_custom_call.1} parent=0
    #allocation2 [shape = 'u8[8192]{0}', space=vmem, size = 0x2000, scoped, tag = 'input window, operand 0']
    #allocation3 [shape = 's32[2]{0}', space=sflag, size = 0x8, scoped, tag = 'scoped memory for tpu_custom_call.1']
    #allocation4 [shape = 's32[2]{0}', space=sflag, size = 0x8, scoped, tag = 'scoped memory for tpu_custom_call.1']
    #allocation5 [shape = 'u8[16384]{0}', space=vmem, size = 0x4000, scoped, tag = 'input window, operand 1, single buffered']
    #allocation6 [shape = 's32[1]{0}', space=sflag, size = 0x4, scoped, tag = 'scoped memory for tpu_custom_call.1']
    #allocation7 [shape = 'u8[16384]{0}', space=vmem, size = 0x4000, scoped, tag = 'input window, operand 3, single buffered']
    #allocation8 [shape = 'u8[8192]{0}', space=vmem, size = 0x2000, scoped, tag = 'output window, operand 0']
    %12 = vsyncpa [#allocation3], 0
    %s13 = scalar_lea.sflag [#allocation3], 1
    %14 = vsyncpa %s13, 0
    %15 = vsyncpa [#allocation6], 0
    %16 = vsyncpa [#allocation4], 0
    %s17 = scalar_lea.sflag [#allocation4], 1
    %18 = vsyncpa %s17, 0
    loop: start=0, step=1, limit=4
    $region2: #{tpu_custom_call.1} parent=1 // loop_pre_header
      _
    $region3: #{tpu_custom_call.1} parent=1 // loop_header
      %s20 = sphi 0, %s24
      %p21 = scmp.ge.s32.totalorder %s20, 4
      %s30 = sphi 0, %s32
      %s33 = sphi 0, %s30
      %s34 = sphi 0, %s33
      %s50 = sphi 0, %s34
      %s54 = sphi 0, %s54
      %s56 = sphi 0, %s54
      %s57 = sphi 0, %s56
      %s71 = sphi 0, %s57
      %s75 = sphi 0, %s75
      %s77 = sphi 0, %s75
      %s78 = sphi 0, %s77
      %s92 = sphi 0, %s78
      %s96 = sphi 0, %s96
      %s98 = sphi 0, %s96
      %s99 = sphi 0, %s98
      %s113 = sphi 0, %s99
      %s117 = sphi 0, %s117
      %s119 = sphi 0, %s117
      %s120 = sphi 0, %s119
      %s134 = sphi 0, %s120
      %s138 = sphi 0, %s138
      %s140 = sphi 0, %s138
      %s141 = sphi 0, %s140
      %s155 = sphi 0, %s141
      %s159 = sphi 0, %s159
      %s161 = sphi 0, %s159
      %s162 = sphi 0, %s161
      %s176 = sphi 0, %s162
      %s182 = sphi 0, %s184
      %s185 = sphi 0, %s182
      %s186 = sphi 0, %s185
      %s202 = sphi 0, %s186
    $region4: #{tpu_custom_call.1} parent=1 // loop_header_branch
      %23 = sbr.rel (%p21) target = $region8
    $region5: #{tpu_custom_call.1} parent=1 // loop_body
      %s25 = ssub.s32 %s20, 1
      %s26 = ssub.s32 %s20, 2
      %s27 = sadd.s32 %s20, 1
      %s28 = ssub.s32 %s20, %s27
      %p29 = scmp.eq.s32.totalorder %s28, 0
      %s31 = sadd.s32 %s30, 1
      %s32 = scalar_select %p29, %s30, %s31
      %p35 = pneg %p29
      %p36 = scmp.eq.s32.totalorder %s20, 1
      %p37 = por %p35, %p36
      %p38 = scmp.ne.s32.totalorder %s30, %s33
      %p39 = scmp.eq.s32.totalorder %s20, 0
      %p40 = por %p38, %p39
      %p41 = scmp.ne.s32.totalorder %s30, %s33
      %p42 = scmp.eq.s32.totalorder %s25, 1
      %p43 = por %p41, %p42
      %p44 = scmp.ne.s32.totalorder %s33, %s34
      %p45 = scmp.eq.s32.totalorder %s25, 0
      %p46 = por %p44, %p45
      %p47 = scmp.ne.s32.totalorder %s33, %s34
      %p48 = scmp.eq.s32.totalorder %s26, 1
      %p49 = por %p47, %p48
      %p51 = scmp.ne.s32.totalorder %s34, %s50
      %p52 = scmp.eq.s32.totalorder %s26, 0
      %p53 = por %p51, %p52
      %s55 = sadd.s32 %s54, 1
      %p58 = scmp.eq.s32.totalorder %s20, 1
      %p59 = scmp.ne.s32.totalorder %s54, %s56
      %p60 = scmp.eq.s32.totalorder %s20, 0
      %p61 = por %p59, %p60
      %p62 = scmp.ne.s32.totalorder %s54, %s56
      %p63 = scmp.eq.s32.totalorder %s25, 1
      %p64 = por %p62, %p63
      %p65 = scmp.ne.s32.totalorder %s56, %s57
      %p66 = scmp.eq.s32.totalorder %s25, 0
      %p67 = por %p65, %p66
      %p68 = scmp.ne.s32.totalorder %s56, %s57
      %p69 = scmp.eq.s32.totalorder %s26, 1
      %p70 = por %p68, %p69
      %p72 = scmp.ne.s32.totalorder %s57, %s71
      %p73 = scmp.eq.s32.totalorder %s26, 0
      %p74 = por %p72, %p73
      %s76 = sadd.s32 %s75, 1
      %p79 = scmp.eq.s32.totalorder %s20, 1
      %p80 = scmp.ne.s32.totalorder %s75, %s77
      %p81 = scmp.eq.s32.totalorder %s20, 0
      %p82 = por %p80, %p81
      %p83 = scmp.ne.s32.totalorder %s75, %s77
      %p84 = scmp.eq.s32.totalorder %s25, 1
      %p85 = por %p83, %p84
      %p86 = scmp.ne.s32.totalorder %s77, %s78
      %p87 = scmp.eq.s32.totalorder %s25, 0
      %p88 = por %p86, %p87
      %p89 = scmp.ne.s32.totalorder %s77, %s78
      %p90 = scmp.eq.s32.totalorder %s26, 1
      %p91 = por %p89, %p90
      %p93 = scmp.ne.s32.totalorder %s78, %s92
      %p94 = scmp.eq.s32.totalorder %s26, 0
      %p95 = por %p93, %p94
      %s97 = sadd.s32 %s96, 1
      %p100 = scmp.eq.s32.totalorder %s20, 1
      %p101 = scmp.ne.s32.totalorder %s96, %s98
      %p102 = scmp.eq.s32.totalorder %s20, 0
      %p103 = por %p101, %p102
      %p104 = scmp.ne.s32.totalorder %s96, %s98
      %p105 = scmp.eq.s32.totalorder %s25, 1
      %p106 = por %p104, %p105
      %p107 = scmp.ne.s32.totalorder %s98, %s99
      %p108 = scmp.eq.s32.totalorder %s25, 0
      %p109 = por %p107, %p108
      %p110 = scmp.ne.s32.totalorder %s98, %s99
      %p111 = scmp.eq.s32.totalorder %s26, 1
      %p112 = por %p110, %p111
      %p114 = scmp.ne.s32.totalorder %s99, %s113
      %p115 = scmp.eq.s32.totalorder %s26, 0
      %p116 = por %p114, %p115
      %s118 = sadd.s32 %s117, 1
      %p121 = scmp.eq.s32.totalorder %s20, 1
      %p122 = scmp.ne.s32.totalorder %s117, %s119
      %p123 = scmp.eq.s32.totalorder %s20, 0
      %p124 = por %p122, %p123
      %p125 = scmp.ne.s32.totalorder %s117, %s119
      %p126 = scmp.eq.s32.totalorder %s25, 1
      %p127 = por %p125, %p126
      %p128 = scmp.ne.s32.totalorder %s119, %s120
      %p129 = scmp.eq.s32.totalorder %s25, 0
      %p130 = por %p128, %p129
      %p131 = scmp.ne.s32.totalorder %s119, %s120
      %p132 = scmp.eq.s32.totalorder %s26, 1
      %p133 = por %p131, %p132
      %p135 = scmp.ne.s32.totalorder %s120, %s134
      %p136 = scmp.eq.s32.totalorder %s26, 0
      %p137 = por %p135, %p136
      %s139 = sadd.s32 %s138, 1
      %p142 = scmp.eq.s32.totalorder %s20, 1
      %p143 = scmp.ne.s32.totalorder %s138, %s140
      %p144 = scmp.eq.s32.totalorder %s20, 0
      %p145 = por %p143, %p144
      %p146 = scmp.ne.s32.totalorder %s138, %s140
      %p147 = scmp.eq.s32.totalorder %s25, 1
      %p148 = por %p146, %p147
      %p149 = scmp.ne.s32.totalorder %s140, %s141
      %p150 = scmp.eq.s32.totalorder %s25, 0
      %p151 = por %p149, %p150
      %p152 = scmp.ne.s32.totalorder %s140, %s141
      %p153 = scmp.eq.s32.totalorder %s26, 1
      %p154 = por %p152, %p153
      %p156 = scmp.ne.s32.totalorder %s141, %s155
      %p157 = scmp.eq.s32.totalorder %s26, 0
      %p158 = por %p156, %p157
      %s160 = sadd.s32 %s159, 1
      %p163 = scmp.eq.s32.totalorder %s20, 1
      %p164 = scmp.ne.s32.totalorder %s159, %s161
      %p165 = scmp.eq.s32.totalorder %s20, 0
      %p166 = por %p164, %p165
      %p167 = scmp.ne.s32.totalorder %s159, %s161
      %p168 = scmp.eq.s32.totalorder %s25, 1
      %p169 = por %p167, %p168
      %p170 = scmp.ne.s32.totalorder %s161, %s162
      %p171 = scmp.eq.s32.totalorder %s25, 0
      %p172 = por %p170, %p171
      %p173 = scmp.ne.s32.totalorder %s161, %s162
      %p174 = scmp.eq.s32.totalorder %s26, 1
      %p175 = por %p173, %p174
      %p177 = scmp.ne.s32.totalorder %s162, %s176
      %p178 = scmp.eq.s32.totalorder %s26, 0
      %p179 = por %p177, %p178
      %s180 = ssub.s32 %s20, %s27
      %p181 = scmp.eq.s32.totalorder %s180, 0
      %s183 = sadd.s32 %s182, 1
      %s184 = scalar_select %p181, %s182, %s183
      %p187 = pneg %p181
      %p188 = scmp.eq.s32.totalorder %s20, 1
      %p189 = por %p187, %p188
      %p190 = scmp.ne.s32.totalorder %s182, %s185
      %p191 = scmp.eq.s32.totalorder %s20, 0
      %p192 = por %p190, %p191
      %p193 = scmp.ne.s32.totalorder %s182, %s185
      %p194 = scmp.eq.s32.totalorder %s25, 1
      %p195 = por %p193, %p194
      %p196 = scmp.ne.s32.totalorder %s185, %s186
      %p197 = scmp.eq.s32.totalorder %s25, 0
      %p198 = por %p196, %p197
      %p199 = scmp.ne.s32.totalorder %s185, %s186
      %p200 = scmp.eq.s32.totalorder %s26, 1
      %p201 = por %p199, %p200
      %p203 = scmp.ne.s32.totalorder %s186, %s202
      %p204 = scmp.eq.s32.totalorder %s26, 0
      %p205 = por %p203, %p204
      %p206 = scmp.le.s32.totalorder 1, %s20
      %p207 = scmp.lt.s32.totalorder %s20, 3
      %p208 = pnand %p206, %p207
      %p209 = pneg %p208
      // Predicated region
      $region9: #{tpu_custom_call.1} parent=5 // pred_check
        _
      $region10: #{tpu_custom_call.1} parent=5 // pred_check_branch
        %211 = sbr.rel (%p208) target = $region12
      $region11: #{tpu_custom_call.1} parent=5 // pred_region
        %s212 = ssub.s32 %s20, 1
        // Predicated region
        $region13: #{tpu_custom_call.1} parent=11 // pred_check
          %p213 = pneg %p67
        $region14: #{tpu_custom_call.1} parent=11 // pred_check_branch
          %215 = sbr.rel (%p213) target = $region16
        $region15: #{tpu_custom_call.1} parent=11 // pred_region
          %s217 = ssub.s32 512, 512
          %218 = vsyncadd [#allocation6], %s217
          %s219 = sshll.u32 [#allocation5], 4
          %s220 = int_to_ptr.vmem [resolvable:$true] %s219
          %225 = dma.hbm_to_vmem [thread:$0]  %s1, 512, %s220, [#allocation6], 128, 128, 8
        $region16: #{tpu_custom_call.1} parent=11 // pred_fallthru
          _
        // Predicated region
        $region17: #{tpu_custom_call.1} parent=11 // pred_check
          %p226 = pneg %p88
        $region18: #{tpu_custom_call.1} parent=11 // pred_check_branch
          %228 = sbr.rel (%p226) target = $region20
        $region19: #{tpu_custom_call.1} parent=11 // pred_region
          _
        $region20: #{tpu_custom_call.1} parent=11 // pred_fallthru
          _
        // Predicated region
        $region21: #{tpu_custom_call.1} parent=11 // pred_check
          %p229 = pneg %p109
        $region22: #{tpu_custom_call.1} parent=11 // pred_check_branch
          %231 = sbr.rel (%p229) target = $region24
        $region23: #{tpu_custom_call.1} parent=11 // pred_region
          %s233 = ssub.s32 512, 512
          %234 = vsyncadd [#allocation6], %s233
          %s235 = sshll.u32 [#allocation7], 4
          %s236 = int_to_ptr.vmem [resolvable:$true] %s235
          %241 = dma.hbm_to_vmem [thread:$0]  %s3, 512, %s236, [#allocation6], 128, 128, 8
        $region24: #{tpu_custom_call.1} parent=11 // pred_fallthru
          _
        // Predicated region
        $region25: #{tpu_custom_call.1} parent=11 // pred_check
          %p242 = pneg %p130
        $region26: #{tpu_custom_call.1} parent=11 // pred_check_branch
          %244 = sbr.rel (%p242) target = $region28
        $region27: #{tpu_custom_call.1} parent=11 // pred_region
          _
        $region28: #{tpu_custom_call.1} parent=11 // pred_fallthru
          _
        // Predicated region
        $region29: #{tpu_custom_call.1} parent=11 // pred_check
          %p245 = pneg %p151
        $region30: #{tpu_custom_call.1} parent=11 // pred_check_branch
          %247 = sbr.rel (%p245) target = $region32
        $region31: #{tpu_custom_call.1} parent=11 // pred_region
          _
        $region32: #{tpu_custom_call.1} parent=11 // pred_fallthru
          _
        // Predicated region
        $region33: #{tpu_custom_call.1} parent=11 // pred_check
          %p248 = pneg %p172
        $region34: #{tpu_custom_call.1} parent=11 // pred_check_branch
          %250 = sbr.rel (%p248) target = $region36
        $region35: #{tpu_custom_call.1} parent=11 // pred_region
          _
        $region36: #{tpu_custom_call.1} parent=11 // pred_fallthru
          _
      $region12: #{tpu_custom_call.1} parent=5 // pred_fallthru
        _
      %p251 = scmp.lt.s32.totalorder %s20, 2
      // Predicated region
      $region37: #{tpu_custom_call.1} parent=5 // pred_check
        %p252 = pneg %p251
      $region38: #{tpu_custom_call.1} parent=5 // pred_check_branch
        %254 = sbr.rel (%p252) target = $region40
      $region39: #{tpu_custom_call.1} parent=5 // pred_region
        // Predicated region
        $region41: #{tpu_custom_call.1} parent=39 // pred_check
          %p255 = pneg %p40
        $region42: #{tpu_custom_call.1} parent=39 // pred_check_branch
          %257 = sbr.rel (%p255) target = $region44
        $region43: #{tpu_custom_call.1} parent=39 // pred_region
          %s258 = sand.u32 %s30, 1
          %s259 = scalar_lea.sflag [#allocation3], %s258
          %s260 = sand.u32 %s30, 1
          %s261 = smul.addr %s260, 8
          %s262 = scalar_lea.vmem [#allocation2], %s261
          %s264 = ssub.s32 128, 128
          %265 = vsyncadd %s259, %s264
          %s266 = smul.addr %s20, 128
          %s267 = scalar_lea.hbm %s0, %s266
          %s269 = sshll.u32 %s262, 4
          %s270 = int_to_ptr.vmem [resolvable:$true] %s269
          %272 = dma.hbm_to_vmem [thread:$0]  %s267, 128, %s270, %s259
        $region44: #{tpu_custom_call.1} parent=39 // pred_fallthru
          _
      $region40: #{tpu_custom_call.1} parent=5 // pred_fallthru
        _
      %p273 = scmp.le.s32.totalorder 1, %s20
      %p274 = scmp.lt.s32.totalorder %s20, 3
      %p275 = pnand %p273, %p274
      %p276 = pneg %p275
      // Predicated region
      $region45: #{tpu_custom_call.1} parent=5 // pred_check
        _
      $region46: #{tpu_custom_call.1} parent=5 // pred_check_branch
        %278 = sbr.rel (%p275) target = $region48
      $region47: #{tpu_custom_call.1} parent=5 // pred_region
        %s279 = ssub.s32 %s20, 1
        %s280 = sand.u32 %s33, 1
        %s281 = scalar_lea.sflag [#allocation3], %s280
        %s282 = sand.u32 %s33, 1
        %s283 = smul.addr %s282, 8
        %s284 = scalar_lea.vmem [#allocation2], %s283
        // Predicated region
        $region49: #{tpu_custom_call.1} parent=47 // pred_check
          %p285 = pneg %p46
        $region50: #{tpu_custom_call.1} parent=47 // pred_check_branch
          %287 = sbr.rel (%p285) target = $region52
        $region51: #{tpu_custom_call.1} parent=47 // pred_region
          %288 = dma.done %s281, 128
        $region52: #{tpu_custom_call.1} parent=47 // pred_fallthru
          _
        // Predicated region
        $region53: #{tpu_custom_call.1} parent=47 // pred_check
          %p289 = pneg %p67
        $region54: #{tpu_custom_call.1} parent=47 // pred_check_branch
          %291 = sbr.rel (%p289) target = $region56
        $region55: #{tpu_custom_call.1} parent=47 // pred_region
          %292 = dma.done [#allocation6], 512
        $region56: #{tpu_custom_call.1} parent=47 // pred_fallthru
          _
        // Predicated region
        $region57: #{tpu_custom_call.1} parent=47 // pred_check
          %p293 = pneg %p109
        $region58: #{tpu_custom_call.1} parent=47 // pred_check_branch
          %295 = sbr.rel (%p293) target = $region60
        $region59: #{tpu_custom_call.1} parent=47 // pred_region
          %296 = dma.done [#allocation6], 512
        $region60: #{tpu_custom_call.1} parent=47 // pred_fallthru
          _
        %s297 = sand.u32 %s33, 1
        %s298 = scalar_lea.sflag [#allocation3], %s297
        %s299 = sand.u32 %s33, 1
        %s300 = smul.addr %s299, 8
        %s301 = scalar_lea.vmem [#allocation2], %s300
        %p302 = pneg %p46
        %p303 = pneg %p43
        %p304 = pneg %p67
        %p305 = pneg %p64
        %p306 = pneg %p88
        %p307 = pneg %p85
        %p308 = pneg %p109
        %p309 = pneg %p106
        %p310 = pneg %p130
        %p311 = pneg %p127
        %p312 = pneg %p151
        %p313 = pneg %p148
        %p314 = pneg %p172
        %p315 = pneg %p169
        %p316 = pneg %p198
        %p317 = pneg %p195
        %s318 = sand.u32 %s185, 1
        %s319 = scalar_lea.sflag [#allocation4], %s318
        %s320 = sand.u32 %s185, 1
        %s321 = smul.addr %s320, 8
        %s322 = scalar_lea.vmem [#allocation8], %s321
        %v323 = vld [vmem:[%s284] sm:$0xff]
        %v324 = vld [vmem:[#allocation5] sm:$0xff]
        %v325 = vld [vmem:[#allocation5 + $0x8] sm:$0xff]
        %v326 = vld [vmem:[#allocation5 + $0x10] sm:$0xff]
        %v327 = vld [vmem:[#allocation5 + $0x18] sm:$0xff]
        %v328 = vld [vmem:[%s2] sm:$0x1]
        %v330 = vlaneseq
        %v331 = vshrl.u32 %v330, 7
        %v332 = vsub.s32 0, %v331
        %v333 = vrot.slane %v328, %v332
        %vm335 = vcmask 261120
        %v337 = vsel %vm335, %v323, 0
        %339 = vmatprep.subr.mxu0 0.0
        %340 = vmatpush1.msra.mxu0 %v324
        %341 = vmatprep.subr.mxu0 0.0
        %342 = vmatpush1.msra.mxu0 %v325
        %343 = vmatprep.subr.mxu0 0.0
        %344 = vmatpush1.msra.mxu0 %v326
        %345 = vmatprep.subr.mxu0 0.0
        %346 = vmatpush1.msra.mxu0 %v327
        %347 = vmatprep.subr.mxu0 0.0
        %348 = vmatpush1.msra.mxu0 0.0
        %349 = vmatprep.subr.mxu0 0.0
        %350 = vmatpush1.msra.mxu0 0.0
        %351 = vmatprep.subr.mxu0 0.0
        %352 = vmatpush1.msra.mxu0 0.0
        %353 = vmatprep.subr.mxu0 0.0
        %354 = vmatpush1.msra.mxu0 0.0
        %355 = vmatprep.subr.mxu0 0.0
        %356 = vmatpush1.msra.mxu0 0.0
        %357 = vmatprep.subr.mxu0 0.0
        %358 = vmatpush1.msra.mxu0 0.0
        %359 = vmatprep.subr.mxu0 0.0
        %360 = vmatpush1.msra.mxu0 0.0
        %361 = vmatprep.subr.mxu0 0.0
        %362 = vmatpush1.msra.mxu0 0.0
        %363 = vmatprep.subr.mxu0 0.0
        %364 = vmatpush1.msra.mxu0 0.0
        %365 = vmatprep.subr.mxu0 0.0
        %366 = vmatpush1.msra.mxu0 0.0
        %367 = vmatprep.subr.mxu0 0.0
        %368 = vmatpush1.msra.mxu0 0.0
        %369 = vmatprep.subr.mxu0 0.0
        %370 = vmatpush1.msra.mxu0 0.0
        %371 = vmatprep.subr.mxu0 0.0
        %372 = vmatpush1.msra.mxu0 0.0
        %373 = vmatprep.subr.mxu0 0.0
        %374 = vmatpush1.msra.mxu0 0.0
        %375 = vmatprep.subr.mxu0 0.0
        %376 = vmatpush1.msra.mxu0 0.0
        %377 = vmatprep.subr.mxu0 0.0
        %378 = vmatpush1.msra.mxu0 0.0
        %379 = vmatprep.subr.mxu0 0.0
        %380 = vmatpush1.msra.mxu0 0.0
        %381 = vmatprep.subr.mxu0 0.0
        %382 = vmatpush1.msra.mxu0 0.0
        %383 = vmatprep.subr.mxu0 0.0
        %384 = vmatpush1.msra.mxu0 0.0
        %385 = vmatprep.subr.mxu0 0.0
        %386 = vmatpush1.msra.mxu0 0.0
        %387 = vmatprep.subr.mxu0 0.0
        %388 = vmatpush1.msra.mxu0 0.0
        %389 = vmatprep.subr.mxu0 0.0
        %390 = vmatpush1.msra.mxu0 0.0
        %391 = vmatprep.subr.mxu0 0.0
        %392 = vmatpush1.msra.mxu0 0.0
        %393 = vmatprep.subr.mxu0 0.0
        %394 = vmatpush1.msra.mxu0 0.0
        %395 = vmatprep.subr.mxu0 0.0
        %396 = vmatpush1.msra.mxu0 0.0
        %397 = vmatprep.subr.mxu0 0.0
        %398 = vmatpush1.msra.mxu0 0.0
        %399 = vmatprep.subr.mxu0 0.0
        %400 = vmatpush1.msra.mxu0 0.0
        %401 = vmatprep.subr.mxu0 0.0
        %402 = vmatpush1.msra.mxu0 0.0
        %403 = vmatprep.mubr.f32.mxu0 0.0
        %404 = vmatmul.mubr.f32.gmra.mrb[0].mxu0 %v337
        %v405 = vpop.f32.mrb[0].mxu0
        %v406 = vadd.f32 %v333, %v405
        %v407 = vpop.f32.mrb[0].mxu0
        %408 = vdwg.mxu0
        %v409 = vmax.f32 %v406, 0.0
        %v410 = vld [vmem:[#allocation7] sm:$0xff]
        %v411 = vld [vmem:[#allocation7 + $0x8] sm:$0xff]
        %v412 = vld [vmem:[#allocation7 + $0x10] sm:$0xff]
        %v413 = vld [vmem:[#allocation7 + $0x18] sm:$0xff]
        %v414 = vld [vmem:[%s4] sm:$0x1]
        %v416 = vlaneseq
        %v417 = vshrl.u32 %v416, 7
        %v418 = vsub.s32 0, %v417
        %v419 = vrot.slane %v414, %v418
        %v422 = vsel %vm335, %v409, 0
        %424 = vmatprep.subr.mxu0 0.0
        %425 = vmatpush1.msra.mxu0 %v410
        %426 = vmatprep.subr.mxu0 0.0
        %427 = vmatpush1.msra.mxu0 %v411
        %428 = vmatprep.subr.mxu0 0.0
        %429 = vmatpush1.msra.mxu0 %v412
        %430 = vmatprep.subr.mxu0 0.0
        %431 = vmatpush1.msra.mxu0 %v413
        %432 = vmatprep.subr.mxu0 0.0
        %433 = vmatpush1.msra.mxu0 0.0
        %434 = vmatprep.subr.mxu0 0.0
        %435 = vmatpush1.msra.mxu0 0.0
        %436 = vmatprep.subr.mxu0 0.0
        %437 = vmatpush1.msra.mxu0 0.0
        %438 = vmatprep.subr.mxu0 0.0
        %439 = vmatpush1.msra.mxu0 0.0
        %440 = vmatprep.subr.mxu0 0.0
        %441 = vmatpush1.msra.mxu0 0.0
        %442 = vmatprep.subr.mxu0 0.0
        %443 = vmatpush1.msra.mxu0 0.0
        %444 = vmatprep.subr.mxu0 0.0
        %445 = vmatpush1.msra.mxu0 0.0
        %446 = vmatprep.subr.mxu0 0.0
        %447 = vmatpush1.msra.mxu0 0.0
        %448 = vmatprep.subr.mxu0 0.0
        %449 = vmatpush1.msra.mxu0 0.0
        %450 = vmatprep.subr.mxu0 0.0
        %451 = vmatpush1.msra.mxu0 0.0
        %452 = vmatprep.subr.mxu0 0.0
        %453 = vmatpush1.msra.mxu0 0.0
        %454 = vmatprep.subr.mxu0 0.0
        %455 = vmatpush1.msra.mxu0 0.0
        %456 = vmatprep.subr.mxu0 0.0
        %457 = vmatpush1.msra.mxu0 0.0
        %458 = vmatprep.subr.mxu0 0.0
        %459 = vmatpush1.msra.mxu0 0.0
        %460 = vmatprep.subr.mxu0 0.0
        %461 = vmatpush1.msra.mxu0 0.0
        %462 = vmatprep.subr.mxu0 0.0
        %463 = vmatpush1.msra.mxu0 0.0
        %464 = vmatprep.subr.mxu0 0.0
        %465 = vmatpush1.msra.mxu0 0.0
        %466 = vmatprep.subr.mxu0 0.0
        %467 = vmatpush1.msra.mxu0 0.0
        %468 = vmatprep.subr.mxu0 0.0
        %469 = vmatpush1.msra.mxu0 0.0
        %470 = vmatprep.subr.mxu0 0.0
        %471 = vmatpush1.msra.mxu0 0.0
        %472 = vmatprep.subr.mxu0 0.0
        %473 = vmatpush1.msra.mxu0 0.0
        %474 = vmatprep.subr.mxu0 0.0
        %475 = vmatpush1.msra.mxu0 0.0
        %476 = vmatprep.subr.mxu0 0.0
        %477 = vmatpush1.msra.mxu0 0.0
        %478 = vmatprep.subr.mxu0 0.0
        %479 = vmatpush1.msra.mxu0 0.0
        %480 = vmatprep.subr.mxu0 0.0
        %481 = vmatpush1.msra.mxu0 0.0
        %482 = vmatprep.subr.mxu0 0.0
        %483 = vmatpush1.msra.mxu0 0.0
        %484 = vmatprep.subr.mxu0 0.0
        %485 = vmatpush1.msra.mxu0 0.0
        %486 = vmatprep.subr.mxu0 0.0
        %487 = vmatpush1.msra.mxu0 0.0
        %488 = vmatprep.mubr.f32.mxu0 0.0
        %489 = vmatmul.mubr.f32.gmra.mrb[0].mxu0 %v422
        %v490 = vpop.f32.mrb[0].mxu0
        %v491 = vadd.f32 %v419, %v490
        %v492 = vpop.f32.mrb[0].mxu0
        %493 = vdwg.mxu0
        %v494 = vadd.f32 %v491, %v323
        %v495 = vsel %vm335, %v494, 0.0
        %496 = vadd.xlane.f32.xlu0 %v495
        %v497 = vpop.xlane.xlu0 %496
        %v498 = vrcp.pop 32.0
        %v499 = vmul.f32 %v497, %v498
        %v500 = vsub.f32 %v494, %v499
        %v501 = vmul.f32 %v500, %v500
        %v502 = vsel %vm335, %v501, 0.0
        %503 = vadd.xlane.f32.xlu0 %v502
        %v504 = vpop.xlane.xlu0 %503
        %v505 = vmul.f32 %v504, %v498
        %v506 = vadd.f32 %v505, 1e-05
        %v507 = vrsqrt.pop %v506
        %v508 = vmul.f32 %v500, %v507
        %v509 = vld [vmem:[%s5] sm:$0x1]
        %v511 = vlaneseq
        %v512 = vshrl.u32 %v511, 7
        %v513 = vsub.s32 0, %v512
        %v514 = vrot.slane %v509, %v513
        %v516 = vmul.f32 %v508, %v514
        %v517 = vld [vmem:[%s6] sm:$0x1]
        %v519 = vlaneseq
        %v520 = vshrl.u32 %v519, 7
        %v521 = vsub.s32 0, %v520
        %v522 = vrot.slane %v517, %v521
        %v524 = vadd.f32 %v516, %v522
        %525 = vst.msk [vmem:[%s322] sm:$0xff] %vm335, %v524
        %s526 = sand.u32 %s185, 1
        %s527 = scalar_lea.sflag [#allocation4], %s526
        %s528 = sand.u32 %s185, 1
        %s529 = smul.addr %s528, 8
        %s530 = scalar_lea.vmem [#allocation8], %s529
        // Predicated region
        $region61: #{tpu_custom_call.1} parent=47 // pred_check
          %p531 = pneg %p195
        $region62: #{tpu_custom_call.1} parent=47 // pred_check_branch
          %533 = sbr.rel (%p531) target = $region64
        $region63: #{tpu_custom_call.1} parent=47 // pred_region
          %s535 = ssub.s32 128, 128
          %536 = vsyncadd %s527, %s535
          %s537 = smul.addr %s25, 128
          %s538 = scalar_lea.hbm %s7, %s537
          %s540 = sshll.u32 %s530, 4
          %s541 = int_to_ptr.vmem [resolvable:$true] %s540
          %543 = dma.vmem_to_hbm [thread:$0]  %s541, 128, %s538, %s527
        $region64: #{tpu_custom_call.1} parent=47 // pred_fallthru
          _
      $region48: #{tpu_custom_call.1} parent=5 // pred_fallthru
        _
      %p544 = scmp.le.s32.totalorder 2, %s20
      // Predicated region
      $region65: #{tpu_custom_call.1} parent=5 // pred_check
        %p545 = pneg %p544
      $region66: #{tpu_custom_call.1} parent=5 // pred_check_branch
        %547 = sbr.rel (%p545) target = $region68
      $region67: #{tpu_custom_call.1} parent=5 // pred_region
        %s548 = ssub.s32 %s20, 2
        // Predicated region
        $region69: #{tpu_custom_call.1} parent=67 // pred_check
          %p549 = pneg %p201
        $region70: #{tpu_custom_call.1} parent=67 // pred_check_branch
          %551 = sbr.rel (%p549) target = $region72
        $region71: #{tpu_custom_call.1} parent=67 // pred_region
          %s552 = sand.u32 %s186, 1
          %s553 = scalar_lea.sflag [#allocation4], %s552
          %s554 = sand.u32 %s186, 1
          %s555 = smul.addr %s554, 8
          %s556 = scalar_lea.vmem [#allocation8], %s555
          %557 = dma.done %s553, 128
        $region72: #{tpu_custom_call.1} parent=67 // pred_fallthru
          _
      $region68: #{tpu_custom_call.1} parent=5 // pred_fallthru
        _
    $region6: #{tpu_custom_call.1} parent=1 // loop_footer
      %s24 = sadd.s32 1, %s20
    $region7: #{tpu_custom_call.1} parent=1 // loop_footer_branch
      %19 = sbr.rel target = $region3
    $region8: #{tpu_custom_call.1} parent=1 // loop_exit
      _
    %558 = vsyncpa [#allocation3], 1
    %s559 = scalar_lea.sflag [#allocation3], 1
    %560 = vsyncpa %s559, 1
    %561 = vsyncpa [#allocation6], 1
    %562 = vsyncpa [#allocation4], 1
    %s563 = scalar_lea.sflag [#allocation4], 1
    %564 = vsyncpa %s563, 1

</llo_original>
